<compile_context>
chip_gen: v6e
topology: v6e:2x2x1
jax: 0.10.0
libtpu: 0.0.40
codegen_flags: <defaults>
</compile_context>

<pallas_src>
import math

import jax
import jax.numpy as jnp
from jax.experimental import pallas as pl
from jax.experimental.pallas import tpu as pltpu


# ----------------------------- helpers --------------------------------------


def _round_up(n, m):
    return ((n + m - 1) // m) * m


def _sublane(dtype):
    # native sublane granule: f32 -> 8, bf16 -> 16, int8 -> 32
    return max(8, 32 // jnp.dtype(dtype).itemsize)


def _vmem_budget_bytes():
    """Per-core VMEM budget with headroom (v5e/v6e: 128 MiB, v7x: 64 MiB)."""
    try:
        cap = int(pltpu.get_tpu_info().vmem_capacity_bytes)
    except Exception:
        cap = 64 * 1024 * 1024          # conservative default (v7x-sized)
    return max(8 * 1024 * 1024, (cap * 3) // 4)


def _const_spec(shape, index_map, single_buffer):
    """BlockSpec for an operand whose block index is constant across the grid.
    Single-buffering it frees VMEM that goes to larger activation tiles."""
    if single_buffer:
        return pl.BlockSpec(shape, index_map, pipeline_mode=pl.Buffered(1))
    return pl.BlockSpec(shape, index_map)


def _moving_avg_matrix(window_size, kernel_size):
    """(L, L) matrix M such that moving_mean = M @ x_time for the
    replicate-padded, stride-1 AvgPool1d used by DLinear."""
    L, K = window_size, kernel_size
    pad = (K - 1) // 2
    idx = jnp.clip(jnp.arange(L)[:, None] + jnp.arange(K)[None, :] - pad, 0, L - 1)
    rows = jnp.broadcast_to(jnp.arange(L)[:, None], idx.shape)
    return jnp.zeros((L, L), jnp.float32).at[rows, idx].add(1.0 / K)


# ----------------------------- kernels --------------------------------------


def _shared_rows_kernel(x_ref, w_ref, b_ref, o_ref):
    # x: (R_blk, L)  w: (L, F128)  b: (1, F128)  o: (R_blk, F128)
    o_ref[...] = (jnp.dot(x_ref[...], w_ref[...],
                          preferred_element_type=jnp.float32)
                  + b_ref[...]).astype(o_ref.dtype)


def _shared_native_kernel(x_ref, w_ref, b_ref, o_ref):
    # Native-layout path: x: (1, L, C)  w: (F8, L)  b: (F8, 1)  o: (1, F8, C)
    o_ref[0] = (jnp.dot(w_ref[...], x_ref[0],
                        preferred_element_type=jnp.float32)
                + b_ref[...]).astype(o_ref.dtype)


def _individual_kernel(x_ref, w_ref, b_ref, o_ref):
    # x: (C_blk, B_blk, L)  w: (C_blk, L, F_pad)  b: (C_blk, 1, F_pad)
    # o: (C_blk, B_blk, F_pad) — a block of channels × a block of batch rows.
    acc = jnp.einsum('cbl,clf->cbf', x_ref[...], w_ref[...],
                     preferred_element_type=jnp.float32)
    o_ref[...] = (acc + b_ref[...]).astype(o_ref.dtype)


# ----------------------------- param folding (done once) --------------------


def prepare_dlinear_params(params, *, kernel_size, individual,
                           compute_dtype=jnp.float32):
    """Fold moving-average + decomposition + both Linears into kernel-ready
    effective weights.  Call ONCE per parameter set (hoisted out of forward)."""
    assert kernel_size % 2 == 1, "DLinear moving average assumes odd kernel_size"
    if individual:
        wt, ws, bt, bs = params                       # (C,F,L),(C,F,L),(C,F),(C,F)
        C, Fsz, L = wt.shape
    else:
        wt, ws, bt, bs = params                       # (F,L),(F,L),(F,1),(F,1)
        Fsz, L = wt.shape

    M = _moving_avg_matrix(L, kernel_size)            # (L, L)
    I = jnp.eye(L, dtype=jnp.float32)

    if individual:
        F_pad = _round_up(Fsz, 128)                   # lane-dense forecast dim
        w_eff = (jnp.einsum('cfl,lm->cfm', wt, M)
                 + jnp.einsum('cfl,lm->cfm', ws, I - M))           # (C, F, L)
        w_k = jnp.transpose(w_eff, (0, 2, 1))                       # (C, L, F)
        w_k = jnp.pad(w_k, ((0, 0), (0, 0), (0, F_pad - Fsz)))
        b_k = jnp.pad((bt + bs)[:, None, :],
                      ((0, 0), (0, 0), (0, F_pad - Fsz)))           # (C, 1, F_pad)
        return dict(individual=True, L=L, F=Fsz, C=C, F_pad=F_pad,
                    compute_dtype=compute_dtype,
                    w=w_k.astype(compute_dtype), b=b_k.astype(jnp.float32))

    w_eff = wt @ M + ws @ (I - M)                                   # (F, L)
    b_eff = bt[:, 0] + bs[:, 0]                                     # (F,)
    F128 = _round_up(Fsz, 128)
    F8 = _round_up(Fsz, 8)
    return dict(
        individual=False, L=L, F=Fsz, F128=F128, F8=F8,
        compute_dtype=compute_dtype,
        # rows path:   (B*C, L) @ (L, F128)  — lane-dense output
        w_rows=jnp.pad(w_eff.T, ((0, 0), (0, F128 - Fsz))).astype(compute_dtype),
        b_rows=jnp.pad(b_eff[None, :], ((0, 0), (0, F128 - Fsz))).astype(jnp.float32),
        # native path: (F8, L) @ (L, C) per batch element — no wrapper transposes
        w_nat=jnp.pad(w_eff, ((0, F8 - Fsz), (0, 0))).astype(compute_dtype),
        b_nat=jnp.pad(b_eff[:, None], ((0, F8 - Fsz), (0, 0))).astype(jnp.float32),
    )


# ----------------------------- call paths ------------------------------------


def _shared_rows_call(x, p, single_buffer):
    B, L, C = x.shape
    cdt = p['compute_dtype']
    Fsz, F128 = p['F'], p['F128']
    isz = jnp.dtype(cdt).itemsize
    osz = jnp.dtype(x.dtype).itemsize
    g = _sublane(cdt)
    budget = _vmem_budget_bytes()
    w_bufs = 1 if single_buffer else 2

    R = B * C
    R_blk = min(_round_up(R, g), 1024)      # big row blocks -> near HBM roofline

    def footprint(rb):                       # double-buffered x & out, weight w_bufs
        return (2 * rb * L * isz + 2 * rb * F128 * osz
                + w_bufs * (L * F128 * isz + F128 * 4))

    while R_blk > g and footprint(R_blk) > budget:
        R_blk = max(g, _round_up(R_blk // 2, g))
    R_pad = _round_up(R, R_blk)

    x_k = jnp.transpose(x, (0, 2, 1)).reshape(R, L).astype(cdt)
    x_k = jnp.pad(x_k, ((0, R_pad - R), (0, 0)))

    out = pl.pallas_call(
        _shared_rows_kernel,
        out_shape=jax.ShapeDtypeStruct((R_pad, F128), x.dtype),
        grid=(R_pad // R_blk,),
        in_specs=[
            pl.BlockSpec((R_blk, L), lambda r: (r, 0)),
            _const_spec((L, F128), lambda r: (0, 0), single_buffer),
            _const_spec((1, F128), lambda r: (0, 0), single_buffer),
        ],
        out_specs=pl.BlockSpec((R_blk, F128), lambda r: (r, 0)),
        compiler_params=pltpu.CompilerParams(
            dimension_semantics=("parallel",), vmem_limit_bytes=budget),
    )(x_k, p['w_rows'], p['b_rows'])
    # NOTE: if the consumer accepts (B, C, F), the transpose below can be skipped.
    out = out[:R, :Fsz].reshape(B, C, Fsz)             # (B, C, F)
    return jnp.transpose(out, (0, 2, 1))               # (B, F, C)


def _shared_native_call(x, p, single_buffer):
    # x stays in its native (B, L, C) layout; output is produced as (B, F, C)
    # directly -> no wrapper transpose/reshape HBM passes.
    B, L, C = x.shape
    cdt = p['compute_dtype']
    Fsz, F8 = p['F'], p['F8']
    budget = _vmem_budget_bytes()

    x_k = x.astype(cdt)                                # no-op when dtypes match
    out = pl.pallas_call(
        _shared_native_kernel,
        out_shape=jax.ShapeDtypeStruct((B, F8, C), x.dtype),
        grid=(B,),
        in_specs=[
            pl.BlockSpec((1, L, C), lambda b: (b, 0, 0)),
            _const_spec((F8, L), lambda b: (0, 0), single_buffer),
            _const_spec((F8, 1), lambda b: (0, 0), single_buffer),
        ],
        out_specs=pl.BlockSpec((1, F8, C), lambda b: (b, 0, 0)),
        compiler_params=pltpu.CompilerParams(
            dimension_semantics=("parallel",), vmem_limit_bytes=budget),
    )(x_k, p['w_nat'], p['b_nat'])
    return out if F8 == Fsz else out[:, :Fsz, :]       # (B, F, C)


def _individual_call(x, p):
    B, L, C = x.shape
    cdt = p['compute_dtype']
    Fsz, F_pad = p['F'], p['F_pad']
    isz = jnp.dtype(cdt).itemsize
    osz = jnp.dtype(x.dtype).itemsize
    g = _sublane(cdt)
    budget = _vmem_budget_bytes()

    B_blk = min(_round_up(B, g), 512)
    C_blk = max(1, min(C, max(1, 1024 // B_blk)))      # ~1024 MXU rows per step

    def footprint(cb, bb):
        return (2 * cb * bb * L * isz + 2 * cb * bb * F_pad * osz
                + 2 * cb * (L * F_pad * isz + F_pad * 4))

    while footprint(C_blk, B_blk) > budget and (C_blk > 1 or B_blk > g):
        if C_blk > 1:
            C_blk = max(1, C_blk // 2)
        else:
            B_blk = max(g, _round_up(B_blk // 2, g))

    C_pad = _round_up(C, C_blk)
    B_pad = _round_up(B, B_blk)

    x_k = jnp.transpose(x, (2, 0, 1)).astype(cdt)      # (C, B, L)
    x_k = jnp.pad(x_k, ((0, C_pad - C), (0, B_pad - B), (0, 0)))
    w, b = p['w'], p['b']
    if C_pad != C:
        w = jnp.pad(w, ((0, C_pad - C), (0, 0), (0, 0)))
        b = jnp.pad(b, ((0, C_pad - C), (0, 0), (0, 0)))

    out = pl.pallas_call(
        _individual_kernel,
        out_shape=jax.ShapeDtypeStruct((C_pad, B_pad, F_pad), x.dtype),
        grid=(C_pad // C_blk, B_pad // B_blk),
        in_specs=[
            pl.BlockSpec((C_blk, B_blk, L), lambda c, bi: (c, bi, 0)),
            pl.BlockSpec((C_blk, L, F_pad), lambda c, bi: (c, 0, 0)),
            pl.BlockSpec((C_blk, 1, F_pad), lambda c, bi: (c, 0, 0)),
        ],
        out_specs=pl.BlockSpec((C_blk, B_blk, F_pad), lambda c, bi: (c, bi, 0)),
        compiler_params=pltpu.CompilerParams(
            dimension_semantics=("parallel", "parallel"),
            vmem_limit_bytes=budget),
    )(x_k, w, b)
    out = out[:C, :B, :Fsz]                            # (C, B, F)
    return jnp.transpose(out, (1, 2, 0))               # (B, F, C)


def dlinear_forward(x, prepared):
    """Pallas LTSF_DLinear forward.  x: (B, L, C) -> (B, F, C).
    `prepared` comes from prepare_dlinear_params (weights folded once)."""
    B, L, C = x.shape
    assert L == prepared['L']
    if prepared['individual']:
        assert C == prepared['C']
        return _individual_call(x, prepared)

    # Wide channel counts: consume x in native layout (lane-dense in C, no
    # wrapper transposes).  Narrow C: fold B*C onto the MXU rows instead.
    cdt = prepared['compute_dtype']
    isz = jnp.dtype(cdt).itemsize
    osz = jnp.dtype(x.dtype).itemsize
    F8 = prepared['F8']
    native_fp = (2 * L * C * isz + 2 * F8 * C * osz
                 + 2 * (F8 * L * isz + F8 * 4))
    call = (_shared_native_call
            if (C >= 128 and native_fp <= _vmem_budget_bytes())
            else _shared_rows_call)
    try:
        return call(x, prepared, single_buffer=True)
    except Exception:
        # pl.Buffered(1) unsupported on this jax/libtpu combo -> fall back to
        # default double-buffered weight/bias blocks.
        return call(x, prepared, single_buffer=False)


def dlinear_forward_raw(x, params, *, kernel_size, individual,
                        compute_dtype=jnp.float32):
    """Convenience: fold + run (for serving, call prepare_* once and reuse)."""
    prepared = prepare_dlinear_params(params, kernel_size=kernel_size,
                                      individual=individual,
                                      compute_dtype=compute_dtype)
    return dlinear_forward(x, prepared)


# ----------------------------- pure-JAX reference ----------------------------


def dlinear_reference(x, params, *, kernel_size, individual):
    """Pure-JAX reference mirroring the PyTorch forward."""
    B, L, C = x.shape
    pad = (kernel_size - 1) // 2
    front = jnp.repeat(x[:, 0:1, :], pad, axis=1)
    end = jnp.repeat(x[:, -1:, :], pad, axis=1)
    xp = jnp.concatenate([front, x, end], axis=1)
    mm = jnp.mean(jnp.stack([xp[:, j:j + L, :] for j in range(kernel_size)], 0),
                  axis=0)
    res = x - mm
    mm_t = jnp.transpose(mm, (0, 2, 1))            # (B, C, L)
    res_t = jnp.transpose(res, (0, 2, 1))
    if individual:
        wt, ws, bt, bs = params                    # (C,F,L), (C,F)
        trend = jnp.einsum('bcl,cfl->bcf', mm_t, wt) + bt[None]
        seas = jnp.einsum('bcl,cfl->bcf', res_t, ws) + bs[None]
    else:
        wt, ws, bt, bs = params                    # (F,L), (F,1)
        trend = jnp.einsum('bcl,fl->bcf', mm_t, wt) + bt[:, 0][None, None, :]
        seas = jnp.einsum('bcl,fl->bcf', res_t, ws) + bs[:, 0][None, None, :]
    out = trend + seas                             # (B, C, F)
    return jnp.transpose(out, (0, 2, 1))           # (B, F, C)


# ----------------------------- params ----------------------------------------


def init_params(key, *, window_size, forcast_size, feature_size, individual):
    """Matches the module's __init__: weights = 1/window * ones; biases keep
    torch.nn.Linear's default uniform(-1/sqrt(in), 1/sqrt(in)) init."""
    bound = 1.0 / math.sqrt(window_size)
    k1, k2 = jax.random.split(key)
    if individual:
        wt = jnp.full((feature_size, forcast_size, window_size),
                      1.0 / window_size, jnp.float32)
        ws = jnp.full((feature_size, forcast_size, window_size),
                      1.0 / window_size, jnp.float32)
        bt = jax.random.uniform(k1, (feature_size, forcast_size),
                                jnp.float32, -bound, bound)
        bs = jax.random.uniform(k2, (feature_size, forcast_size),
                                jnp.float32, -bound, bound)
    else:
        wt = jnp.full((forcast_size, window_size), 1.0 / window_size, jnp.float32)
        ws = jnp.full((forcast_size, window_size), 1.0 / window_size, jnp.float32)
        bt = jax.random.uniform(k1, (forcast_size, 1), jnp.float32, -bound, bound)
        bs = jax.random.uniform(k2, (forcast_size, 1), jnp.float32, -bound, bound)
    return wt, ws, bt, bs


# ----------------------------- main -------------------------------------------


if __name__ == "__main__":
    L, Fsz, K = 16, 8, 5                 # window_size, forcast_size, kernel_size
    key = jax.random.PRNGKey(0)
    kx, kx_wide, kx_big, kp0, kp1 = jax.random.split(key, 5)

    checks = []

    # shared weights (independent of channel count)
    B, C = 2, 4
    x = jax.random.normal(kx, (B, L, C), jnp.float32)
    params_s = init_params(kp0, window_size=L, forcast_size=Fsz,
                           feature_size=C, individual=False)
    prep_s = prepare_dlinear_params(params_s, kernel_size=K, individual=False)

    # 1) shared path, narrow C  (B*C folded onto MXU rows), f32
    out = jax.block_until_ready(dlinear_forward(x, prep_s))
    ref = dlinear_reference(x, params_s, kernel_size=K, individual=False)
    checks.append(out.shape == (B, Fsz, C)
                  and bool(jnp.allclose(out, ref, atol=1e-5, rtol=1e-5)))

    # 2) shared rows path with multiple grid steps + row padding
    B_big = 300
    x_big = jax.random.normal(kx_big, (B_big, L, C), jnp.float32)
    out = jax.block_until_ready(dlinear_forward(x_big, prep_s))
    ref = dlinear_reference(x_big, params_s, kernel_size=K, individual=False)
    checks.append(out.shape == (B_big, Fsz, C)
                  and bool(jnp.allclose(out, ref, atol=1e-5, rtol=1e-5)))

    # 3) shared path, wide C (native-layout path: no wrapper transposes), f32
    C_wide = 128
    x_wide = jax.random.normal(kx_wide, (B, L, C_wide), jnp.float32)
    out = jax.block_until_ready(dlinear_forward(x_wide, prep_s))
    ref = dlinear_reference(x_wide, params_s, kernel_size=K, individual=False)
    checks.append(out.shape == (B, Fsz, C_wide)
                  and bool(jnp.allclose(out, ref, atol=1e-5, rtol=1e-5)))

    # 4) individual=True path (per-channel Linears, blocked channels), f32
    params_i = init_params(kp1, window_size=L, forcast_size=Fsz,
                           feature_size=C, individual=True)
    prep_i = prepare_dlinear_params(params_i, kernel_size=K, individual=True)
    out = jax.block_until_ready(dlinear_forward(x, prep_i))
    ref = dlinear_reference(x, params_i, kernel_size=K, individual=True)
    checks.append(out.shape == (B, Fsz, C)
                  and bool(jnp.allclose(out, ref, atol=1e-5, rtol=1e-5)))

    # 5) bf16 activations/weights with f32 MXU accumulation (loose tolerance)
    prep_bf16 = prepare_dlinear_params(params_s, kernel_size=K, individual=False,
                                       compute_dtype=jnp.bfloat16)
    out = jax.block_until_ready(dlinear_forward(x, prep_bf16))
    ref = dlinear_reference(x, params_s, kernel_size=K, individual=False)
    checks.append(out.shape == (B, Fsz, C)
                  and bool(jnp.allclose(out, ref, atol=5e-2, rtol=5e-2)))

    print("KERNEL_OK" if all(checks) else "KERNEL_MISMATCH")
</pallas_src>

<mosaic_0001>
module attributes {stable_mosaic.version = 11 : i64} {
  func.func @_shared_rows_kernel(%arg0: i32, %arg1: memref<8x16xf32, #tpu.memory_space<vmem>>, %arg2: memref<16x128xf32, #tpu.memory_space<vmem>>, %arg3: memref<1x128xf32, #tpu.memory_space<vmem>>, %arg4: memref<8x128xf32, #tpu.memory_space<vmem>>) attributes {dimension_semantics = [#tpu.dimension_semantics<parallel>], iteration_bounds = array<i64: 1>, scalar_prefetch = 0 : i64, scratch_operands = 0 : i64, tpu.core_type = #tpu.core_type<tc>, window_params = [{transform_indices = @transform_0, window_bounds = array<i64: 8, 16>}, {pipeline_mode = #tpu.pipeline_mode<synchronous>, transform_indices = @transform_1, window_bounds = array<i64: 16, 128>}, {pipeline_mode = #tpu.pipeline_mode<synchronous>, transform_indices = @transform_2, window_bounds = array<i64: 1, 128>}, {transform_indices = @transform_3, window_bounds = array<i64: 8, 128>}]} {
    %c0 = arith.constant 0 : index
    %c0_0 = arith.constant 0 : index
    %0 = vector.load %arg1[%c0, %c0_0] : memref<8x16xf32, #tpu.memory_space<vmem>>, vector<8x16xf32>
    %c0_1 = arith.constant 0 : index
    %c0_2 = arith.constant 0 : index
    %1 = vector.load %arg2[%c0_1, %c0_2] : memref<16x128xf32, #tpu.memory_space<vmem>>, vector<16x128xf32>
    %cst = arith.constant dense<0.000000e+00> : vector<8x128xf32>
    %2 = tpu.matmul %0, %1, %cst {dimension_numbers = #tpu.dot_dimension_numbers<[1], [0], [0], [1], [0, 0, 1, 1], [], []>} : vector<8x16xf32>, vector<16x128xf32>, vector<8x128xf32> -> vector<8x128xf32>
    %c0_3 = arith.constant 0 : index
    %c0_4 = arith.constant 0 : index
    %3 = vector.load %arg3[%c0_3, %c0_4] : memref<1x128xf32, #tpu.memory_space<vmem>>, vector<1x128xf32>
    %4 = vector.broadcast %3 : vector<1x128xf32> to vector<8x128xf32>
    %5 = arith.addf %2, %4 : vector<8x128xf32>
    %c0_5 = arith.constant 0 : index
    %c0_6 = arith.constant 0 : index
    %6 = vector.load %arg4[%c0_5, %c0_6] : memref<8x128xf32, #tpu.memory_space<vmem>>, vector<8x128xf32>
    tpu.vector_store %arg4[%c0_5, %c0_6], %5 {strides = array<i32>} : memref<8x128xf32, #tpu.memory_space<vmem>>, vector<8x128xf32>,
    return
  }
  func.func @transform_0(%arg0: i32) -> (i32, i32) {
    %c0_i32 = arith.constant 0 : i32
    %c0_i32_0 = arith.constant 0 : i32
    return %arg0, %c0_i32 : i32, i32
  }
  func.func @transform_1(%arg0: i32) -> (i32, i32) {
    %c0_i32 = arith.constant 0 : i32
    %c0_i32_0 = arith.constant 0 : i32
    %c0_i32_1 = arith.constant 0 : i32
    return %c0_i32, %c0_i32_0 : i32, i32
  }
  func.func @transform_2(%arg0: i32) -> (i32, i32) {
    %c0_i32 = arith.constant 0 : i32
    %c0_i32_0 = arith.constant 0 : i32
    %c0_i32_1 = arith.constant 0 : i32
    return %c0_i32, %c0_i32_0 : i32, i32
  }
  func.func @transform_3(%arg0: i32) -> (i32, i32) {
    %c0_i32 = arith.constant 0 : i32
    %c0_i32_0 = arith.constant 0 : i32
    return %arg0, %c0_i32 : i32, i32
  }
}

module attributes {stable_mosaic.version = 11 : i64} {
  func.func @_shared_rows_kernel(%arg0: i32, %arg1: memref<8x16xf32, #tpu.memory_space<vmem>>, %arg2: memref<16x128xf32, #tpu.memory_space<vmem>>, %arg3: memref<1x128xf32, #tpu.memory_space<vmem>>, %arg4: memref<8x128xf32, #tpu.memory_space<vmem>>) attributes {dimension_semantics = [#tpu.dimension_semantics<parallel>], iteration_bounds = array<i64: 1>, scalar_prefetch = 0 : i64, scratch_operands = 0 : i64, tpu.core_type = #tpu.core_type<tc>, window_params = [{transform_indices = @transform_0, window_bounds = array<i64: 8, 16>}, {pipeline_mode = #tpu.pipeline_mode<synchronous>, transform_indices = @transform_1, window_bounds = array<i64: 16, 128>}, {pipeline_mode = #tpu.pipeline_mode<synchronous>, transform_indices = @transform_2, window_bounds = array<i64: 1, 128>}, {transform_indices = @transform_3, window_bounds = array<i64: 8, 128>}]} {
    %c0 = arith.constant 0 : index
    %c0_0 = arith.constant 0 : index
    %0 = vector.load %arg1[%c0, %c0_0] : memref<8x16xf32, #tpu.memory_space<vmem>>, vector<8x16xf32>
    %c0_1 = arith.constant 0 : index
    %c0_2 = arith.constant 0 : index
    %1 = vector.load %arg2[%c0_1, %c0_2] : memref<16x128xf32, #tpu.memory_space<vmem>>, vector<16x128xf32>
    %cst = arith.constant dense<0.000000e+00> : vector<8x128xf32>
    %2 = tpu.matmul %0, %1, %cst {dimension_numbers = #tpu.dot_dimension_numbers<[1], [0], [0], [1], [0, 0, 1, 1], [], []>} : vector<8x16xf32>, vector<16x128xf32>, vector<8x128xf32> -> vector<8x128xf32>
    %c0_3 = arith.constant 0 : index
    %c0_4 = arith.constant 0 : index
    %3 = vector.load %arg3[%c0_3, %c0_4] : memref<1x128xf32, #tpu.memory_space<vmem>>, vector<1x128xf32>
    %4 = vector.broadcast %3 : vector<1x128xf32> to vector<8x128xf32>
    %5 = arith.addf %2, %4 : vector<8x128xf32>
    %c0_5 = arith.constant 0 : index
    %c0_6 = arith.constant 0 : index
    %6 = vector.load %arg4[%c0_5, %c0_6] : memref<8x128xf32, #tpu.memory_space<vmem>>, vector<8x128xf32>
    tpu.vector_store %arg4[%c0_5, %c0_6], %5 {strides = array<i32>} : memref<8x128xf32, #tpu.memory_space<vmem>>, vector<8x128xf32>,
    return
  }
  func.func @transform_0(%arg0: i32) -> (i32, i32) {
    %c0_i32 = arith.constant 0 : i32
    %c0_i32_0 = arith.constant 0 : i32
    return %arg0, %c0_i32 : i32, i32
  }
  func.func @transform_1(%arg0: i32) -> (i32, i32) {
    %c0_i32 = arith.constant 0 : i32
    %c0_i32_0 = arith.constant 0 : i32
    %c0_i32_1 = arith.constant 0 : i32
    return %c0_i32, %c0_i32_0 : i32, i32
  }
  func.func @transform_2(%arg0: i32) -> (i32, i32) {
    %c0_i32 = arith.constant 0 : i32
    %c0_i32_0 = arith.constant 0 : i32
    %c0_i32_1 = arith.constant 0 : i32
    return %c0_i32, %c0_i32_0 : i32, i32
  }
  func.func @transform_3(%arg0: i32) -> (i32, i32) {
    %c0_i32 = arith.constant 0 : i32
    %c0_i32_0 = arith.constant 0 : i32
    return %arg0, %c0_i32 : i32, i32
  }
}

</mosaic_0001>

<llo_original>
// kernel: tpu_custom_call.1
$region0: #{tpu_custom_call.1}
  #allocation0 [shape = 'u32[]', space=smem, size = 0x4, offset = 0x4, fixed_abs, tag = 'smem constant byte address 0x4 - core index']
  #allocation1 [shape = 'u32[144,128]{1,0:T(1,128)}', space=vmem, size = 0x12000, scoped, tag = 'internal scratch']
  %s0 = inlined_call_operand.hbm [shape: f32[8,16], index: 0, kind: input, shape index: {}]
  %s1 = inlined_call_operand.hbm [shape: f32[16,128], index: 1, kind: input, shape index: {}]
  %s2 = inlined_call_operand.vmem [shape: f32[1,128], index: 2, kind: input, shape index: {}]
  %s3 = inlined_call_operand.hbm [shape: f32[8,128], index: 3, kind: output, shape index: {}]
  %s4 = sld [smem:[#allocation0]]
  $region30: #{tpu_custom_call.1} parent=0
    _
  %s6 = ssub.s32 1, %s4
  %s7 = scalar_select 0, %s6, %s4
  $region1: #{tpu_custom_call.1} parent=0
    #allocation2 [shape = 'u8[4096]{0}', space=vmem, size = 0x1000, scoped, tag = 'input window, operand 0, single buffered']
    #allocation3 [shape = 's32[1]{0}', space=sflag, size = 0x4, scoped, tag = 'scoped memory for tpu_custom_call.1']
    #allocation4 [shape = 's32[1]{0}', space=sflag, size = 0x4, scoped, tag = 'scoped memory for tpu_custom_call.1']
    #allocation5 [shape = 'u8[8192]{0}', space=vmem, size = 0x2000, scoped, tag = 'input window, operand 1, single buffered']
    #allocation6 [shape = 's32[1]{0}', space=sflag, size = 0x4, scoped, tag = 'scoped memory for tpu_custom_call.1']
    #allocation7 [shape = 'u8[4096]{0}', space=vmem, size = 0x1000, scoped, tag = 'output window, operand 0, single buffered']
    %8 = vsyncpa [#allocation3], 0
    %9 = vsyncpa [#allocation6], 0
    %10 = vsyncpa [#allocation4], 0
    // Predicated region
    $region2: #{tpu_custom_call.1} parent=1 // pred_check
      _
    $region3: #{tpu_custom_call.1} parent=1 // pred_check_branch
      %12 = sbr.rel (0) target = $region5
    $region4: #{tpu_custom_call.1} parent=1 // pred_region
      %s14 = ssub.s32 128, 128
      %15 = vsyncadd [#allocation3], %s14
      %s17 = sshll.u32 [#allocation2], 4
      %s18 = int_to_ptr.vmem [resolvable:$true] %s17
      %20 = dma.hbm_to_vmem [thread:$0]  %s0, 128, %s18, [#allocation3]
    $region5: #{tpu_custom_call.1} parent=1 // pred_fallthru
      _
    // Predicated region
    $region6: #{tpu_custom_call.1} parent=1 // pred_check
      _
    $region7: #{tpu_custom_call.1} parent=1 // pred_check_branch
      %22 = sbr.rel (0) target = $region9
    $region8: #{tpu_custom_call.1} parent=1 // pred_region
      %s24 = ssub.s32 256, 256
      %25 = vsyncadd [#allocation6], %s24
      %s26 = sshll.u32 [#allocation5], 4
      %s27 = int_to_ptr.vmem [resolvable:$true] %s26
      %32 = dma.hbm_to_vmem [thread:$0]  %s1, 256, %s27, [#allocation6], 128, 128, 8
    $region9: #{tpu_custom_call.1} parent=1 // pred_fallthru
      _
    // Predicated region
    $region10: #{tpu_custom_call.1} parent=1 // pred_check
      _
    $region11: #{tpu_custom_call.1} parent=1 // pred_check_branch
      %34 = sbr.rel (0) target = $region13
    $region12: #{tpu_custom_call.1} parent=1 // pred_region
      _
    $region13: #{tpu_custom_call.1} parent=1 // pred_fallthru
      _
    // Predicated region
    $region14: #{tpu_custom_call.1} parent=1 // pred_check
      _
    $region15: #{tpu_custom_call.1} parent=1 // pred_check_branch
      %36 = sbr.rel (0) target = $region17
    $region16: #{tpu_custom_call.1} parent=1 // pred_region
      %37 = dma.done [#allocation3], 128
    $region17: #{tpu_custom_call.1} parent=1 // pred_fallthru
      _
    // Predicated region
    $region18: #{tpu_custom_call.1} parent=1 // pred_check
      _
    $region19: #{tpu_custom_call.1} parent=1 // pred_check_branch
      %39 = sbr.rel (0) target = $region21
    $region20: #{tpu_custom_call.1} parent=1 // pred_region
      %40 = dma.done [#allocation6], 256
    $region21: #{tpu_custom_call.1} parent=1 // pred_fallthru
      _
    %v41 = vld [vmem:[#allocation2] sm:$0xff]
    %v42 = vld [vmem:[#allocation5] sm:$0xff]
    %v43 = vld [vmem:[#allocation5 + $0x8] sm:$0xff]
    %v44 = vld [vmem:[%s2] sm:$0x1]
    %v46 = vlaneseq
    %v47 = vshrl.u32 %v46, 7
    %v48 = vsub.s32 0, %v47
    %v49 = vrot.slane %v44, %v48
    %vm51 = vcmask 130048
    %v53 = vsel %vm51, %v41, 0
    %55 = vmatprep.subr.mxu0 0.0
    %56 = vmatpush1.msra.mxu0 0.0
    %57 = vmatprep.subr.mxu0 0.0
    %58 = vmatpush1.msra.mxu0 0.0
    %59 = vmatprep.subr.mxu0 0.0
    %60 = vmatpush1.msra.mxu0 0.0
    %61 = vmatprep.subr.mxu0 0.0
    %62 = vmatpush1.msra.mxu0 0.0
    %63 = vmatprep.subr.mxu0 0.0
    %64 = vmatpush1.msra.mxu0 0.0
    %65 = vmatprep.subr.mxu0 0.0
    %66 = vmatpush1.msra.mxu0 0.0
    %67 = vmatprep.subr.mxu0 0.0
    %68 = vmatpush1.msra.mxu0 0.0
    %69 = vmatprep.subr.mxu0 0.0
    %70 = vmatpush1.msra.mxu0 0.0
    %71 = vmatprep.subr.mxu0 0.0
    %72 = vmatpush1.msra.mxu0 0.0
    %73 = vmatprep.subr.mxu0 0.0
    %74 = vmatpush1.msra.mxu0 0.0
    %75 = vmatprep.subr.mxu0 0.0
    %76 = vmatpush1.msra.mxu0 0.0
    %77 = vmatprep.subr.mxu0 0.0
    %78 = vmatpush1.msra.mxu0 0.0
    %79 = vmatprep.subr.mxu0 0.0
    %80 = vmatpush1.msra.mxu0 0.0
    %81 = vmatprep.subr.mxu0 0.0
    %82 = vmatpush1.msra.mxu0 0.0
    %83 = vmatprep.subr.mxu0 0.0
    %84 = vmatpush1.msra.mxu0 %v43
    %85 = vmatprep.subr.mxu0 0.0
    %86 = vmatpush1.msra.mxu0 %v42
    %87 = vmatprep.subr.mxu0 0.0
    %88 = vmatpush2.msra.mxu0 0.0
    %89 = vmatprep.subr.mxu0 0.0
    %90 = vmatpush2.msra.mxu0 0.0
    %91 = vmatprep.subr.mxu0 0.0
    %92 = vmatpush2.msra.mxu0 0.0
    %93 = vmatprep.subr.mxu0 0.0
    %94 = vmatpush2.msra.mxu0 0.0
    %95 = vmatprep.subr.mxu0 0.0
    %96 = vmatpush2.msra.mxu0 0.0
    %97 = vmatprep.subr.mxu0 0.0
    %98 = vmatpush2.msra.mxu0 0.0
    %99 = vmatprep.subr.mxu0 0.0
    %100 = vmatpush2.msra.mxu0 0.0
    %101 = vmatprep.subr.mxu0 0.0
    %102 = vmatpush2.msra.mxu0 0.0
    %103 = vmatprep.subr.mxu0 0.0
    %104 = vmatpush2.msra.mxu0 0.0
    %105 = vmatprep.subr.mxu0 0.0
    %106 = vmatpush2.msra.mxu0 0.0
    %107 = vmatprep.subr.mxu0 0.0
    %108 = vmatpush2.msra.mxu0 0.0
    %109 = vmatprep.subr.mxu0 0.0
    %110 = vmatpush2.msra.mxu0 0.0
    %111 = vmatprep.subr.mxu0 0.0
    %112 = vmatpush2.msra.mxu0 0.0
    %113 = vmatprep.subr.mxu0 0.0
    %114 = vmatpush2.msra.mxu0 0.0
    %115 = vmatprep.subr.mxu0 0.0
    %116 = vmatpush2.msra.mxu0 0.0
    %117 = vmatprep.subr.mxu0 0.0
    %118 = vmatpush2.msra.mxu0 0.0
    %119 = vmatprep.mubr.f32.mxu0 0.0
    %120 = vmatmul.mubr.f32.gmra.mxu0 %v53
    %v121 = vpop.f32.mrf.mxu0
    %v122 = vadd.f32 %v49, %v121
    %v123 = vpop.f32.mrf.mxu0
    %124 = vdwg.mxu0
    %125 = vst [vmem:[#allocation7] sm:$0xff] %v122
    // Predicated region
    $region22: #{tpu_custom_call.1} parent=1 // pred_check
      _
    $region23: #{tpu_custom_call.1} parent=1 // pred_check_branch
      %127 = sbr.rel (0) target = $region25
    $region24: #{tpu_custom_call.1} parent=1 // pred_region
      %s129 = ssub.s32 128, 128
      %130 = vsyncadd [#allocation4], %s129
      %s132 = sshll.u32 [#allocation7], 4
      %s133 = int_to_ptr.vmem [resolvable:$true] %s132
      %135 = dma.vmem_to_hbm [thread:$0]  %s133, 128, %s3, [#allocation4]
    $region25: #{tpu_custom_call.1} parent=1 // pred_fallthru
      _
    // Predicated region
    $region26: #{tpu_custom_call.1} parent=1 // pred_check
      _
    $region27: #{tpu_custom_call.1} parent=1 // pred_check_branch
      %137 = sbr.rel (0) target = $region29
    $region28: #{tpu_custom_call.1} parent=1 // pred_region
      %138 = dma.done [#allocation4], 128
    $region29: #{tpu_custom_call.1} parent=1 // pred_fallthru
      _
    %139 = vsyncpa [#allocation3], 1
    %140 = vsyncpa [#allocation6], 1
    %141 = vsyncpa [#allocation4], 1

// kernel: tpu_custom_call.1
$region0: #{tpu_custom_call.1}
  #allocation0 [shape = 'u32[]', space=smem, size = 0x4, offset = 0x4, fixed_abs, tag = 'smem constant byte address 0x4 - core index']
  #allocation1 [shape = 'u32[144,128]{1,0:T(1,128)}', space=vmem, size = 0x12000, scoped, tag = 'internal scratch']
  %s0 = inlined_call_operand.hbm [shape: f32[8,16], index: 0, kind: input, shape index: {}]
  %s1 = inlined_call_operand.hbm [shape: f32[16,128], index: 1, kind: input, shape index: {}]
  %s2 = inlined_call_operand.vmem [shape: f32[1,128], index: 2, kind: input, shape index: {}]
  %s3 = inlined_call_operand.hbm [shape: f32[8,128], index: 3, kind: output, shape index: {}]
  %s4 = sld [smem:[#allocation0]]
  $region30: #{tpu_custom_call.1} parent=0
    _
  %s6 = ssub.s32 1, %s4
  %s7 = scalar_select 0, %s6, %s4
  $region1: #{tpu_custom_call.1} parent=0
    #allocation2 [shape = 'u8[4096]{0}', space=vmem, size = 0x1000, scoped, tag = 'input window, operand 0, single buffered']
    #allocation3 [shape = 's32[1]{0}', space=sflag, size = 0x4, scoped, tag = 'scoped memory for tpu_custom_call.1']
    #allocation4 [shape = 's32[1]{0}', space=sflag, size = 0x4, scoped, tag = 'scoped memory for tpu_custom_call.1']
    #allocation5 [shape = 'u8[8192]{0}', space=vmem, size = 0x2000, scoped, tag = 'input window, operand 1, single buffered']
    #allocation6 [shape = 's32[1]{0}', space=sflag, size = 0x4, scoped, tag = 'scoped memory for tpu_custom_call.1']
    #allocation7 [shape = 'u8[4096]{0}', space=vmem, size = 0x1000, scoped, tag = 'output window, operand 0, single buffered']
    %8 = vsyncpa [#allocation3], 0
    %9 = vsyncpa [#allocation6], 0
    %10 = vsyncpa [#allocation4], 0
    // Predicated region
    $region2: #{tpu_custom_call.1} parent=1 // pred_check
      _
    $region3: #{tpu_custom_call.1} parent=1 // pred_check_branch
      %12 = sbr.rel (0) target = $region5
    $region4: #{tpu_custom_call.1} parent=1 // pred_region
      %s14 = ssub.s32 128, 128
      %15 = vsyncadd [#allocation3], %s14
      %s17 = sshll.u32 [#allocation2], 4
      %s18 = int_to_ptr.vmem [resolvable:$true] %s17
      %20 = dma.hbm_to_vmem [thread:$0]  %s0, 128, %s18, [#allocation3]
    $region5: #{tpu_custom_call.1} parent=1 // pred_fallthru
      _
    // Predicated region
    $region6: #{tpu_custom_call.1} parent=1 // pred_check
      _
    $region7: #{tpu_custom_call.1} parent=1 // pred_check_branch
      %22 = sbr.rel (0) target = $region9
    $region8: #{tpu_custom_call.1} parent=1 // pred_region
      %s24 = ssub.s32 256, 256
      %25 = vsyncadd [#allocation6], %s24
      %s26 = sshll.u32 [#allocation5], 4
      %s27 = int_to_ptr.vmem [resolvable:$true] %s26
      %32 = dma.hbm_to_vmem [thread:$0]  %s1, 256, %s27, [#allocation6], 128, 128, 8
    $region9: #{tpu_custom_call.1} parent=1 // pred_fallthru
      _
    // Predicated region
    $region10: #{tpu_custom_call.1} parent=1 // pred_check
      _
    $region11: #{tpu_custom_call.1} parent=1 // pred_check_branch
      %34 = sbr.rel (0) target = $region13
    $region12: #{tpu_custom_call.1} parent=1 // pred_region
      _
    $region13: #{tpu_custom_call.1} parent=1 // pred_fallthru
      _
    // Predicated region
    $region14: #{tpu_custom_call.1} parent=1 // pred_check
      _
    $region15: #{tpu_custom_call.1} parent=1 // pred_check_branch
      %36 = sbr.rel (0) target = $region17
    $region16: #{tpu_custom_call.1} parent=1 // pred_region
      %37 = dma.done [#allocation3], 128
    $region17: #{tpu_custom_call.1} parent=1 // pred_fallthru
      _
    // Predicated region
    $region18: #{tpu_custom_call.1} parent=1 // pred_check
      _
    $region19: #{tpu_custom_call.1} parent=1 // pred_check_branch
      %39 = sbr.rel (0) target = $region21
    $region20: #{tpu_custom_call.1} parent=1 // pred_region
      %40 = dma.done [#allocation6], 256
    $region21: #{tpu_custom_call.1} parent=1 // pred_fallthru
      _
    %v41 = vld [vmem:[#allocation2] sm:$0xff]
    %v42 = vld [vmem:[#allocation5] sm:$0xff]
    %v43 = vld [vmem:[#allocation5 + $0x8] sm:$0xff]
    %v44 = vld [vmem:[%s2] sm:$0x1]
    %v46 = vlaneseq
    %v47 = vshrl.u32 %v46, 7
    %v48 = vsub.s32 0, %v47
    %v49 = vrot.slane %v44, %v48
    %vm51 = vcmask 130048
    %v53 = vsel %vm51, %v41, 0
    %55 = vmatprep.subr.mxu0 0.0
    %56 = vmatpush1.msra.mxu0 0.0
    %57 = vmatprep.subr.mxu0 0.0
    %58 = vmatpush1.msra.mxu0 0.0
    %59 = vmatprep.subr.mxu0 0.0
    %60 = vmatpush1.msra.mxu0 0.0
    %61 = vmatprep.subr.mxu0 0.0
    %62 = vmatpush1.msra.mxu0 0.0
    %63 = vmatprep.subr.mxu0 0.0
    %64 = vmatpush1.msra.mxu0 0.0
    %65 = vmatprep.subr.mxu0 0.0
    %66 = vmatpush1.msra.mxu0 0.0
    %67 = vmatprep.subr.mxu0 0.0
    %68 = vmatpush1.msra.mxu0 0.0
    %69 = vmatprep.subr.mxu0 0.0
    %70 = vmatpush1.msra.mxu0 0.0
    %71 = vmatprep.subr.mxu0 0.0
    %72 = vmatpush1.msra.mxu0 0.0
    %73 = vmatprep.subr.mxu0 0.0
    %74 = vmatpush1.msra.mxu0 0.0
    %75 = vmatprep.subr.mxu0 0.0
    %76 = vmatpush1.msra.mxu0 0.0
    %77 = vmatprep.subr.mxu0 0.0
    %78 = vmatpush1.msra.mxu0 0.0
    %79 = vmatprep.subr.mxu0 0.0
    %80 = vmatpush1.msra.mxu0 0.0
    %81 = vmatprep.subr.mxu0 0.0
    %82 = vmatpush1.msra.mxu0 0.0
    %83 = vmatprep.subr.mxu0 0.0
    %84 = vmatpush1.msra.mxu0 %v43
    %85 = vmatprep.subr.mxu0 0.0
    %86 = vmatpush1.msra.mxu0 %v42
    %87 = vmatprep.subr.mxu0 0.0
    %88 = vmatpush2.msra.mxu0 0.0
    %89 = vmatprep.subr.mxu0 0.0
    %90 = vmatpush2.msra.mxu0 0.0
    %91 = vmatprep.subr.mxu0 0.0
    %92 = vmatpush2.msra.mxu0 0.0
    %93 = vmatprep.subr.mxu0 0.0
    %94 = vmatpush2.msra.mxu0 0.0
    %95 = vmatprep.subr.mxu0 0.0
    %96 = vmatpush2.msra.mxu0 0.0
    %97 = vmatprep.subr.mxu0 0.0
    %98 = vmatpush2.msra.mxu0 0.0
    %99 = vmatprep.subr.mxu0 0.0
    %100 = vmatpush2.msra.mxu0 0.0
    %101 = vmatprep.subr.mxu0 0.0
    %102 = vmatpush2.msra.mxu0 0.0
    %103 = vmatprep.subr.mxu0 0.0
    %104 = vmatpush2.msra.mxu0 0.0
    %105 = vmatprep.subr.mxu0 0.0
    %106 = vmatpush2.msra.mxu0 0.0
    %107 = vmatprep.subr.mxu0 0.0
    %108 = vmatpush2.msra.mxu0 0.0
    %109 = vmatprep.subr.mxu0 0.0
    %110 = vmatpush2.msra.mxu0 0.0
    %111 = vmatprep.subr.mxu0 0.0
    %112 = vmatpush2.msra.mxu0 0.0
    %113 = vmatprep.subr.mxu0 0.0
    %114 = vmatpush2.msra.mxu0 0.0
    %115 = vmatprep.subr.mxu0 0.0
    %116 = vmatpush2.msra.mxu0 0.0
    %117 = vmatprep.subr.mxu0 0.0
    %118 = vmatpush2.msra.mxu0 0.0
    %119 = vmatprep.mubr.f32.mxu0 0.0
    %120 = vmatmul.mubr.f32.gmra.mxu0 %v53
    %v121 = vpop.f32.mrf.mxu0
    %v122 = vadd.f32 %v49, %v121
    %v123 = vpop.f32.mrf.mxu0
    %124 = vdwg.mxu0
    %125 = vst [vmem:[#allocation7] sm:$0xff] %v122
    // Predicated region
    $region22: #{tpu_custom_call.1} parent=1 // pred_check
      _
    $region23: #{tpu_custom_call.1} parent=1 // pred_check_branch
      %127 = sbr.rel (0) target = $region25
    $region24: #{tpu_custom_call.1} parent=1 // pred_region
      %s129 = ssub.s32 128, 128
      %130 = vsyncadd [#allocation4], %s129
      %s132 = sshll.u32 [#allocation7], 4
      %s133 = int_to_ptr.vmem [resolvable:$true] %s132
      %135 = dma.vmem_to_hbm [thread:$0]  %s133, 128, %s3, [#allocation4]
    $region25: #{tpu_custom_call.1} parent=1 // pred_fallthru
      _
    // Predicated region
    $region26: #{tpu_custom_call.1} parent=1 // pred_check
      _
    $region27: #{tpu_custom_call.1} parent=1 // pred_check_branch
      %137 = sbr.rel (0) target = $region29
    $region28: #{tpu_custom_call.1} parent=1 // pred_region
      %138 = dma.done [#allocation4], 128
    $region29: #{tpu_custom_call.1} parent=1 // pred_fallthru
      _
    %139 = vsyncpa [#allocation3], 1
    %140 = vsyncpa [#allocation6], 1
    %141 = vsyncpa [#allocation4], 1

</llo_original>
